<compile_context>
chip_gen: v7x
topology: tpu7x:2x2x1
jax: 0.10.0
libtpu: 0.0.40
codegen_flags: <defaults>
</compile_context>

<pallas_src>
import jax
import jax.numpy as jnp
from jax.experimental import pallas as pl
from jax.experimental.pallas import tpu as pltpu

LANE = 128  # lane width; everything is padded to this on the feature axis


def classifier_kernel(xin_ref, w_ref, b_ref, o_ref):
    """Fused forward pass, fully VMEM-resident.

    xin_ref: (2, B, 128) f32   -- [0] = padded input x, [1] = dropout scale mask
    w_ref:   (3, 128, 128) bf16 -- zero-padded, pre-transposed (in x out) weights
    b_ref:   (3, 128) f32       -- zero-padded biases
    o_ref:   (B, 128) f32       -- lane-dense output (cols >= num_classes are 0)
    """
    # ---- F.dropout(x), p=0.5, training: mask * 1/(1-p) precomputed on host.
    # TODO(synk): on real TPU hardware prefer in-kernel pltpu.prng_seed /
    # pltpu.prng_random_bits; host mask is used so the kernel also runs under
    # the CPU interpret checker (no TPU PRNG lowering there).
    h = xin_ref[0] * xin_ref[1]

    b_all = b_ref[...]  # (3, 128) f32, loaded once

    def linear(h, i):
        # bf16 operands for the MXU, f32 accumulation (preferred_element_type).
        return (jnp.dot(h.astype(jnp.bfloat16), w_ref[i],
                        preferred_element_type=jnp.float32)
                + b_all[i][None, :])

    # Two hidden layers: fc -> BatchNorm1d (training batch stats, gamma=1,
    # beta=0) -> ReLU.
    for i in range(2):
        h = linear(h, i)
        mean = jnp.mean(h, axis=0, keepdims=True)
        mean_sq = jnp.mean(h * h, axis=0, keepdims=True)
        var = jnp.maximum(mean_sq - mean * mean, 0.0)   # biased var, fused pass
        h = (h - mean) * jax.lax.rsqrt(var + 1e-5)
        h = jnp.maximum(h, 0.0)

    # Final affine layer; 128-wide lane-dense store.
    o_ref[...] = linear(h, 2)


def _pad2(a, rows, cols):
    r, c = a.shape
    return jnp.pad(a, ((0, rows - r), (0, cols - c)))


def classifier_forward(x, params, dropout_key):
    """params = [(w, b), ...] in PyTorch nn.Linear layout: w (out, in), b (out,)."""
    batch = x.shape[0]
    num_classes = params[-1][0].shape[0]

    # Pack all weights (transposed to in x out, zero-padded to 128x128) into one
    # bf16 slab and all biases into one f32 slab -> 3 input DMAs total.
    w_slab = jnp.stack([_pad2(w.T, LANE, LANE) for (w, _) in params]
                       ).astype(jnp.bfloat16)
    b_slab = jnp.stack([jnp.pad(b, (0, LANE - b.shape[0])) for (_, b) in params]
                       ).astype(jnp.float32)

    # Padded input + dropout scale mask stacked into a single input.
    x_pad = _pad2(x.astype(jnp.float32), batch, LANE)
    keep = jax.random.bernoulli(dropout_key, 0.5, (batch, LANE))
    drop_scale = keep.astype(jnp.float32) * 2.0          # 1/(1-p) with p = 0.5
    xin = jnp.stack([x_pad, drop_scale])

    vmem = pl.BlockSpec(memory_space=pltpu.MemorySpace.VMEM)
    out_padded = pl.pallas_call(
        classifier_kernel,
        out_shape=jax.ShapeDtypeStruct((batch, LANE), jnp.float32),
        in_specs=[vmem, vmem, vmem],
        out_specs=vmem,
    )(xin, w_slab, b_slab)

    # TODO(synk): for batch >= 128, add a batch grid ("parallel" for v7x 2-TC)
    # and restructure BN as accumulate-then-normalize so batch stats stay exact.
    return out_padded[:, :num_classes]


def init_params(key, num_in, hidden_dims, num_classes):
    """PyTorch-layout params mirroring the module's init (kaiming_normal_ fcs)."""
    params = []
    fan_in = num_in
    for hdim in hidden_dims:
        key, kw, kb = jax.random.split(key, 3)
        w = jax.random.normal(kw, (hdim, fan_in), jnp.float32) * jnp.sqrt(2.0 / fan_in)
        bound = 1.0 / jnp.sqrt(float(fan_in))
        b = jax.random.uniform(kb, (hdim,), jnp.float32, -bound, bound)
        params.append((w, b))
        fan_in = hdim
    key, kw, kb = jax.random.split(key, 3)
    bound = 1.0 / jnp.sqrt(float(fan_in))
    wa = jax.random.uniform(kw, (num_classes, fan_in), jnp.float32, -bound, bound)
    ba = jax.random.uniform(kb, (num_classes,), jnp.float32, -bound, bound)
    params.append((wa, ba))
    return params


if __name__ == "__main__":
    # Small shapes consistent with the module: batch=8, numInFeatures=32,
    # hiddenDims=[64, 64], numClasses=14.
    batch, num_in, hidden_dims, num_classes = 8, 32, [64, 64], 14

    key = jax.random.PRNGKey(0)
    key, kx, kdrop = jax.random.split(key, 3)
    x = jax.random.normal(kx, (batch, num_in), jnp.float32)
    params = init_params(key, num_in, hidden_dims, num_classes)

    out = classifier_forward(x, params, kdrop)
    out = jax.block_until_ready(out)
    assert out.shape == (batch, num_classes)
    assert bool(jnp.all(jnp.isfinite(out)))
    print("KERNEL_OK")
</pallas_src>

<mosaic_0001>
module attributes {stable_mosaic.version = 11 : i64} {
  func.func @classifier_kernel(%arg0: memref<2x8x128xf32, #tpu.memory_space<vmem>>, %arg1: memref<3x128x128xbf16, #tpu.memory_space<vmem>>, %arg2: memref<3x128xf32, #tpu.memory_space<vmem>>, %arg3: memref<8x128xf32, #tpu.memory_space<vmem>>) attributes {dimension_semantics = [], scalar_prefetch = 0 : i64, scratch_operands = 0 : i64, tpu.core_type = #tpu.core_type<tc>} {
    %c0 = arith.constant 0 : index
    %c0_0 = arith.constant 0 : index
    %c0_1 = arith.constant 0 : index
    %0 = vector.load %arg0[%c0, %c0_0, %c0_1] : memref<2x8x128xf32, #tpu.memory_space<vmem>>, vector<1x8x128xf32>
    %1 = vector.shape_cast %0 : vector<1x8x128xf32> to vector<8x128xf32>
    %c1 = arith.constant 1 : index
    %c0_2 = arith.constant 0 : index
    %c0_3 = arith.constant 0 : index
    %2 = vector.load %arg0[%c1, %c0_2, %c0_3] : memref<2x8x128xf32, #tpu.memory_space<vmem>>, vector<1x8x128xf32>
    %3 = vector.shape_cast %2 : vector<1x8x128xf32> to vector<8x128xf32>
    %4 = arith.mulf %1, %3 : vector<8x128xf32>
    %c0_4 = arith.constant 0 : index
    %c0_5 = arith.constant 0 : index
    %5 = vector.load %arg2[%c0_4, %c0_5] : memref<3x128xf32, #tpu.memory_space<vmem>>, vector<3x128xf32>
    %6 = arith.truncf %4 : vector<8x128xf32> to vector<8x128xbf16>
    %c0_6 = arith.constant 0 : index
    %c0_7 = arith.constant 0 : index
    %c0_8 = arith.constant 0 : index
    %7 = vector.load %arg1[%c0_6, %c0_7, %c0_8] : memref<3x128x128xbf16, #tpu.memory_space<vmem>>, vector<1x128x128xbf16>
    %8 = vector.shape_cast %7 : vector<1x128x128xbf16> to vector<128x128xbf16>
    %cst = arith.constant dense<0.000000e+00> : vector<8x128xf32>
    %9 = tpu.matmul %6, %8, %cst {dimension_numbers = #tpu.dot_dimension_numbers<[1], [0], [0], [1], [0, 0, 1, 1], [], []>} : vector<8x128xbf16>, vector<128x128xbf16>, vector<8x128xf32> -> vector<8x128xf32>
    %10 = vector.extract_strided_slice %5 {offsets = [0, 0], sizes = [1, 128], strides = [1, 1]} : vector<3x128xf32> to vector<1x128xf32>
    %11 = vector.shape_cast %10 : vector<1x128xf32> to vector<128xf32>
    %12 = vector.shape_cast %11 : vector<128xf32> to vector<1x128xf32>
    %13 = vector.broadcast %12 : vector<1x128xf32> to vector<8x128xf32>
    %14 = arith.addf %9, %13 : vector<8x128xf32>
    %cst_9 = arith.constant dense<0.000000e+00> : vector<128xf32>
    %15 = vector.multi_reduction <add>, %14, %cst_9 [0] : vector<8x128xf32> to vector<128xf32>
    %16 = vector.shape_cast %15 : vector<128xf32> to vector<1x128xf32>
    %cst_10 = arith.constant 8.000000e+00 : f32
    %17 = vector.broadcast %cst_10 : f32 to vector<1x128xf32>
    %18 = arith.divf %16, %17 : vector<1x128xf32>
    %19 = arith.mulf %14, %14 : vector<8x128xf32>
    %cst_11 = arith.constant dense<0.000000e+00> : vector<128xf32>
    %20 = vector.multi_reduction <add>, %19, %cst_11 [0] : vector<8x128xf32> to vector<128xf32>
    %21 = vector.shape_cast %20 : vector<128xf32> to vector<1x128xf32>
    %cst_12 = arith.constant 8.000000e+00 : f32
    %22 = vector.broadcast %cst_12 : f32 to vector<1x128xf32>
    %23 = arith.divf %21, %22 : vector<1x128xf32>
    %24 = arith.mulf %18, %18 : vector<1x128xf32>
    %25 = arith.subf %23, %24 : vector<1x128xf32>
    %cst_13 = arith.constant 0.000000e+00 : f32
    %26 = vector.broadcast %cst_13 : f32 to vector<1x128xf32>
    %27 = arith.maximumf %25, %26 : vector<1x128xf32>
    %28 = vector.broadcast %18 : vector<1x128xf32> to vector<8x128xf32>
    %29 = arith.subf %14, %28 : vector<8x128xf32>
    %cst_14 = arith.constant 9.99999974E-6 : f32
    %30 = vector.broadcast %cst_14 : f32 to vector<1x128xf32>
    %31 = arith.addf %27, %30 : vector<1x128xf32>
    %32 = math.rsqrt %31 : vector<1x128xf32>
    %33 = vector.broadcast %32 : vector<1x128xf32> to vector<8x128xf32>
    %34 = arith.mulf %29, %33 : vector<8x128xf32>
    %cst_15 = arith.constant 0.000000e+00 : f32
    %35 = vector.broadcast %cst_15 : f32 to vector<8x128xf32>
    %36 = arith.maximumf %34, %35 : vector<8x128xf32>
    %37 = arith.truncf %36 : vector<8x128xf32> to vector<8x128xbf16>
    %c1_16 = arith.constant 1 : index
    %c0_17 = arith.constant 0 : index
    %c0_18 = arith.constant 0 : index
    %38 = vector.load %arg1[%c1_16, %c0_17, %c0_18] : memref<3x128x128xbf16, #tpu.memory_space<vmem>>, vector<1x128x128xbf16>
    %39 = vector.shape_cast %38 : vector<1x128x128xbf16> to vector<128x128xbf16>
    %cst_19 = arith.constant dense<0.000000e+00> : vector<8x128xf32>
    %40 = tpu.matmul %37, %39, %cst_19 {dimension_numbers = #tpu.dot_dimension_numbers<[1], [0], [0], [1], [0, 0, 1, 1], [], []>} : vector<8x128xbf16>, vector<128x128xbf16>, vector<8x128xf32> -> vector<8x128xf32>
    %41 = vector.extract_strided_slice %5 {offsets = [1, 0], sizes = [1, 128], strides = [1, 1]} : vector<3x128xf32> to vector<1x128xf32>
    %42 = vector.shape_cast %41 : vector<1x128xf32> to vector<128xf32>
    %43 = vector.shape_cast %42 : vector<128xf32> to vector<1x128xf32>
    %44 = vector.broadcast %43 : vector<1x128xf32> to vector<8x128xf32>
    %45 = arith.addf %40, %44 : vector<8x128xf32>
    %cst_20 = arith.constant dense<0.000000e+00> : vector<128xf32>
    %46 = vector.multi_reduction <add>, %45, %cst_20 [0] : vector<8x128xf32> to vector<128xf32>
    %47 = vector.shape_cast %46 : vector<128xf32> to vector<1x128xf32>
    %cst_21 = arith.constant 8.000000e+00 : f32
    %48 = vector.broadcast %cst_21 : f32 to vector<1x128xf32>
    %49 = arith.divf %47, %48 : vector<1x128xf32>
    %50 = arith.mulf %45, %45 : vector<8x128xf32>
    %cst_22 = arith.constant dense<0.000000e+00> : vector<128xf32>
    %51 = vector.multi_reduction <add>, %50, %cst_22 [0] : vector<8x128xf32> to vector<128xf32>
    %52 = vector.shape_cast %51 : vector<128xf32> to vector<1x128xf32>
    %cst_23 = arith.constant 8.000000e+00 : f32
    %53 = vector.broadcast %cst_23 : f32 to vector<1x128xf32>
    %54 = arith.divf %52, %53 : vector<1x128xf32>
    %55 = arith.mulf %49, %49 : vector<1x128xf32>
    %56 = arith.subf %54, %55 : vector<1x128xf32>
    %cst_24 = arith.constant 0.000000e+00 : f32
    %57 = vector.broadcast %cst_24 : f32 to vector<1x128xf32>
    %58 = arith.maximumf %56, %57 : vector<1x128xf32>
    %59 = vector.broadcast %49 : vector<1x128xf32> to vector<8x128xf32>
    %60 = arith.subf %45, %59 : vector<8x128xf32>
    %cst_25 = arith.constant 9.99999974E-6 : f32
    %61 = vector.broadcast %cst_25 : f32 to vector<1x128xf32>
    %62 = arith.addf %58, %61 : vector<1x128xf32>
    %63 = math.rsqrt %62 : vector<1x128xf32>
    %64 = vector.broadcast %63 : vector<1x128xf32> to vector<8x128xf32>
    %65 = arith.mulf %60, %64 : vector<8x128xf32>
    %cst_26 = arith.constant 0.000000e+00 : f32
    %66 = vector.broadcast %cst_26 : f32 to vector<8x128xf32>
    %67 = arith.maximumf %65, %66 : vector<8x128xf32>
    %68 = arith.truncf %67 : vector<8x128xf32> to vector<8x128xbf16>
    %c2 = arith.constant 2 : index
    %c0_27 = arith.constant 0 : index
    %c0_28 = arith.constant 0 : index
    %69 = vector.load %arg1[%c2, %c0_27, %c0_28] : memref<3x128x128xbf16, #tpu.memory_space<vmem>>, vector<1x128x128xbf16>
    %70 = vector.shape_cast %69 : vector<1x128x128xbf16> to vector<128x128xbf16>
    %cst_29 = arith.constant dense<0.000000e+00> : vector<8x128xf32>
    %71 = tpu.matmul %68, %70, %cst_29 {dimension_numbers = #tpu.dot_dimension_numbers<[1], [0], [0], [1], [0, 0, 1, 1], [], []>} : vector<8x128xbf16>, vector<128x128xbf16>, vector<8x128xf32> -> vector<8x128xf32>
    %72 = vector.extract_strided_slice %5 {offsets = [2, 0], sizes = [1, 128], strides = [1, 1]} : vector<3x128xf32> to vector<1x128xf32>
    %73 = vector.shape_cast %72 : vector<1x128xf32> to vector<128xf32>
    %74 = vector.shape_cast %73 : vector<128xf32> to vector<1x128xf32>
    %75 = vector.broadcast %74 : vector<1x128xf32> to vector<8x128xf32>
    %76 = arith.addf %71, %75 : vector<8x128xf32>
    %c0_30 = arith.constant 0 : index
    %c0_31 = arith.constant 0 : index
    %77 = vector.load %arg3[%c0_30, %c0_31] : memref<8x128xf32, #tpu.memory_space<vmem>>, vector<8x128xf32>
    tpu.vector_store %arg3[%c0_30, %c0_31], %76 {strides = array<i32>} : memref<8x128xf32, #tpu.memory_space<vmem>>, vector<8x128xf32>,
    return
  }
}

</mosaic_0001>

<llo_original>
// kernel: tpu_custom_call.1
$region0: #{tpu_custom_call.1}
  #allocation0 [shape = 'u32[]', space=smem, size = 0x4, offset = 0x4, fixed_abs, tag = 'smem constant byte address 0x4 - core index']
  #allocation1 [shape = 'u32[144,128]{1,0:T(1,128)}', space=vmem, size = 0x12000, scoped, tag = 'internal scratch']
  %s0 = inlined_call_operand.hbm [shape: f32[2,8,128], index: 0, kind: input, shape index: {}]
  %s1 = inlined_call_operand.hbm [shape: bf16[3,128,128], index: 1, kind: input, shape index: {}]
  %s2 = inlined_call_operand.vmem [shape: f32[3,128], index: 2, kind: input, shape index: {}]
  %s3 = inlined_call_operand.hbm [shape: f32[8,128], index: 3, kind: output, shape index: {}]
  %s4 = sld [smem:[#allocation0]]
  $region30: #{tpu_custom_call.1} parent=0
    _
  %s6 = ssub.s32 1, %s4
  %s7 = scalar_select 0, %s6, %s4
  $region1: #{tpu_custom_call.1} parent=0
    #allocation2 [shape = 'u8[8192]{0}', space=vmem, size = 0x2000, scoped, tag = 'input window, operand 0, single buffered']
    #allocation3 [shape = 's32[1]{0}', space=sflag, size = 0x4, scoped, tag = 'scoped memory for tpu_custom_call.1']
    #allocation4 [shape = 's32[1]{0}', space=sflag, size = 0x4, scoped, tag = 'scoped memory for tpu_custom_call.1']
    #allocation5 [shape = 'u8[98304]{0}', space=vmem, size = 0x18000, scoped, tag = 'input window, operand 1, single buffered']
    #allocation6 [shape = 's32[1]{0}', space=sflag, size = 0x4, scoped, tag = 'scoped memory for tpu_custom_call.1']
    #allocation7 [shape = 'u8[4096]{0}', space=vmem, size = 0x1000, scoped, tag = 'output window, operand 0, single buffered']
    %8 = vsyncpa [#allocation3], 0
    %9 = vsyncpa [#allocation6], 0
    %10 = vsyncpa [#allocation4], 0
    // Predicated region
    $region2: #{tpu_custom_call.1} parent=1 // pred_check
      _
    $region3: #{tpu_custom_call.1} parent=1 // pred_check_branch
      %12 = sbr.rel (0) target = $region5
    $region4: #{tpu_custom_call.1} parent=1 // pred_region
      %s14 = ssub.s32 256, 256
      %15 = vsyncadd [#allocation3], %s14
      %s16 = sshll.u32 [#allocation2], 4
      %s17 = int_to_ptr.vmem [resolvable:$true] %s16
      %22 = dma.hbm_to_vmem [thread:$0]  %s0, 256, %s17, [#allocation3], 128, 128, 8
    $region5: #{tpu_custom_call.1} parent=1 // pred_fallthru
      _
    // Predicated region
    $region6: #{tpu_custom_call.1} parent=1 // pred_check
      _
    $region7: #{tpu_custom_call.1} parent=1 // pred_check_branch
      %24 = sbr.rel (0) target = $region9
    $region8: #{tpu_custom_call.1} parent=1 // pred_region
      %s26 = ssub.s32 3072, 3072
      %27 = vsyncadd [#allocation6], %s26
      %s28 = sshll.u32 [#allocation5], 4
      %s29 = int_to_ptr.vmem [resolvable:$true] %s28
      %34 = dma.hbm_to_vmem [thread:$0]  %s1, 3072, %s29, [#allocation6], 64, 64, 4
    $region9: #{tpu_custom_call.1} parent=1 // pred_fallthru
      _
    // Predicated region
    $region10: #{tpu_custom_call.1} parent=1 // pred_check
      _
    $region11: #{tpu_custom_call.1} parent=1 // pred_check_branch
      %36 = sbr.rel (0) target = $region13
    $region12: #{tpu_custom_call.1} parent=1 // pred_region
      _
    $region13: #{tpu_custom_call.1} parent=1 // pred_fallthru
      _
    // Predicated region
    $region14: #{tpu_custom_call.1} parent=1 // pred_check
      _
    $region15: #{tpu_custom_call.1} parent=1 // pred_check_branch
      %38 = sbr.rel (0) target = $region17
    $region16: #{tpu_custom_call.1} parent=1 // pred_region
      %39 = dma.done [#allocation3], 256
    $region17: #{tpu_custom_call.1} parent=1 // pred_fallthru
      _
    // Predicated region
    $region18: #{tpu_custom_call.1} parent=1 // pred_check
      _
    $region19: #{tpu_custom_call.1} parent=1 // pred_check_branch
      %41 = sbr.rel (0) target = $region21
    $region20: #{tpu_custom_call.1} parent=1 // pred_region
      %42 = dma.done [#allocation6], 3072
    $region21: #{tpu_custom_call.1} parent=1 // pred_fallthru
      _
    %v44 = vld [vmem:[#allocation2] sm:$0xff]
    %s45 = scalar_lea.vmem [#allocation2], 8
    %v46 = vld [vmem:[%s45] sm:$0xff]
    %v47 = vmul.f32 %v44, %v46
    %v48 = vld [vmem:[%s2] sm:$0x7]
    %v49 = vpack.c.bf16 %v47, %v47
    %v50 = vld [vmem:[#allocation5] sm:$0xf]
    %v51 = vld [vmem:[#allocation5 + $0x4] sm:$0xf]
    %v52 = vld [vmem:[#allocation5 + $0x8] sm:$0xf]
    %v53 = vld [vmem:[#allocation5 + $0xc] sm:$0xf]
    %v54 = vld [vmem:[#allocation5 + $0x10] sm:$0xf]
    %v55 = vld [vmem:[#allocation5 + $0x14] sm:$0xf]
    %v56 = vld [vmem:[#allocation5 + $0x18] sm:$0xf]
    %v57 = vld [vmem:[#allocation5 + $0x1c] sm:$0xf]
    %v58 = vld [vmem:[#allocation5 + $0x20] sm:$0xf]
    %v59 = vld [vmem:[#allocation5 + $0x24] sm:$0xf]
    %v60 = vld [vmem:[#allocation5 + $0x28] sm:$0xf]
    %v61 = vld [vmem:[#allocation5 + $0x2c] sm:$0xf]
    %v62 = vld [vmem:[#allocation5 + $0x30] sm:$0xf]
    %v63 = vld [vmem:[#allocation5 + $0x34] sm:$0xf]
    %v64 = vld [vmem:[#allocation5 + $0x38] sm:$0xf]
    %v65 = vld [vmem:[#allocation5 + $0x3c] sm:$0xf]
    %v66 = vlaneseq
    %v67 = vshrl.u32 %v66, 7
    %v68 = vsub.s32 0, %v67
    %v69 = vrot.slane %v48, %v68
    %v86 = vunpack.c.l.b16 %v50
    %v87 = vunpack.c.l.b16 %v51
    %v88 = vunpack.c.l.b16 %v52
    %v89 = vunpack.c.l.b16 %v53
    %v90 = vunpack.c.l.b16 %v54
    %v91 = vunpack.c.l.b16 %v55
    %v92 = vunpack.c.l.b16 %v56
    %v93 = vunpack.c.l.b16 %v57
    %v94 = vunpack.c.l.b16 %v58
    %v95 = vunpack.c.l.b16 %v59
    %v96 = vunpack.c.l.b16 %v60
    %v97 = vunpack.c.l.b16 %v61
    %v98 = vunpack.c.l.b16 %v62
    %v99 = vunpack.c.l.b16 %v63
    %v100 = vunpack.c.l.b16 %v64
    %v101 = vunpack.c.l.b16 %v65
    %v102 = vpack.c.b16 %v87, %v86
    %v103 = vpack.c.b16 %v89, %v88
    %v104 = vpack.c.b16 %v91, %v90
    %v105 = vpack.c.b16 %v93, %v92
    %v106 = vpack.c.b16 %v95, %v94
    %v107 = vpack.c.b16 %v97, %v96
    %v108 = vpack.c.b16 %v99, %v98
    %v109 = vpack.c.b16 %v101, %v100
    %118 = vmatprep.subr.bf16.mxu0 0
    %119 = vmatpush1.bf16.msra.mxu0 %v102
    %120 = vmatprep.subr.bf16.mxu0 0
    %121 = vmatpush1.bf16.msra.mxu0 %v103
    %122 = vmatprep.subr.bf16.mxu0 0
    %123 = vmatpush1.bf16.msra.mxu0 %v104
    %124 = vmatprep.subr.bf16.mxu0 0
    %125 = vmatpush1.bf16.msra.mxu0 %v105
    %126 = vmatprep.subr.bf16.mxu0 0
    %127 = vmatpush1.bf16.msra.mxu0 %v106
    %128 = vmatprep.subr.bf16.mxu0 0
    %129 = vmatpush1.bf16.msra.mxu0 %v107
    %130 = vmatprep.subr.bf16.mxu0 0
    %131 = vmatpush1.bf16.msra.mxu0 %v108
    %132 = vmatprep.subr.bf16.mxu0 0
    %133 = vmatpush1.bf16.msra.mxu0 %v109
    %134 = vmatprep.subr.bf16.mxu0 0
    %135 = vmatpush1.bf16.msra.mxu0 0
    %136 = vmatprep.subr.bf16.mxu0 0
    %137 = vmatpush1.bf16.msra.mxu0 0
    %138 = vmatprep.subr.bf16.mxu0 0
    %139 = vmatpush1.bf16.msra.mxu0 0
    %140 = vmatprep.subr.bf16.mxu0 0
    %141 = vmatpush1.bf16.msra.mxu0 0
    %142 = vmatprep.subr.bf16.mxu0 0
    %143 = vmatpush1.bf16.msra.mxu0 0
    %144 = vmatprep.subr.bf16.mxu0 0
    %145 = vmatpush1.bf16.msra.mxu0 0
    %146 = vmatprep.subr.bf16.mxu0 0
    %147 = vmatpush1.bf16.msra.mxu0 0
    %148 = vmatprep.subr.bf16.mxu0 0
    %149 = vmatpush1.bf16.msra.mxu0 0
    %150 = vmatprep.mubr.bf16.mxu0 0
    %151 = vmatmul.mubr.bf16.gmra.mrb[0].mxu0 %v49
    %v152 = vpop.f32.mrb[0].mxu0
    %v153 = vadd.f32 %v69, %v152
    %v154 = vpop.f32.mrb[0].mxu0
    %v155 = vpop.f32.mrb[0].mxu0
    %v156 = vpop.f32.mrb[0].mxu0
    %157 = vdwg.mxu0
    %v158 = vrot.slane %v153, 4
    %v159 = vadd.f32 %v153, %v158
    %v160 = vrot.slane %v159, 2
    %v161 = vadd.f32 %v159, %v160
    %v162 = vrot.slane %v161, 1
    %v163 = vadd.f32 %v161, %v162
    %v164 = vrcp.pop 8.0
    %v165 = vmul.f32 %v163, %v164
    %v166 = vmul.f32 %v153, %v153
    %v167 = vrot.slane %v166, 4
    %v168 = vadd.f32 %v166, %v167
    %v169 = vrot.slane %v168, 2
    %v170 = vadd.f32 %v168, %v169
    %v171 = vrot.slane %v170, 1
    %v172 = vadd.f32 %v170, %v171
    %v173 = vmul.f32 %v172, %v164
    %v174 = vmul.f32 %v165, %v165
    %v175 = vsub.f32 %v173, %v174
    %v176 = vmax.f32 %v175, 0.0
    %v177 = vsub.f32 %v153, %v165
    %v178 = vadd.f32 %v176, 1e-05
    %v179 = vrsqrt.pop %v178
    %v180 = vmul.f32 %v177, %v179
    %v181 = vmax.f32 %v180, 0.0
    %v182 = vpack.c.bf16 %v181, %v181
    %s183 = scalar_lea.vmem [#allocation5], 64
    %v184 = vld [vmem:[%s183] sm:$0xf]
    %v185 = vld [vmem:[%s183 + $0x4] sm:$0xf]
    %v186 = vld [vmem:[%s183 + $0x8] sm:$0xf]
    %v187 = vld [vmem:[%s183 + $0xc] sm:$0xf]
    %v188 = vld [vmem:[%s183 + $0x10] sm:$0xf]
    %v189 = vld [vmem:[%s183 + $0x14] sm:$0xf]
    %v190 = vld [vmem:[%s183 + $0x18] sm:$0xf]
    %v191 = vld [vmem:[%s183 + $0x1c] sm:$0xf]
    %v192 = vld [vmem:[%s183 + $0x20] sm:$0xf]
    %v193 = vld [vmem:[%s183 + $0x24] sm:$0xf]
    %v194 = vld [vmem:[%s183 + $0x28] sm:$0xf]
    %v195 = vld [vmem:[%s183 + $0x2c] sm:$0xf]
    %v196 = vld [vmem:[%s183 + $0x30] sm:$0xf]
    %v197 = vld [vmem:[%s183 + $0x34] sm:$0xf]
    %v198 = vld [vmem:[%s183 + $0x38] sm:$0xf]
    %v199 = vld [vmem:[%s183 + $0x3c] sm:$0xf]
    %v200 = vlaneseq
    %v201 = vshrl.u32 %v200, 7
    %v202 = vsub.s32 1, %v201
    %v203 = vrot.slane %v48, %v202
    %v220 = vunpack.c.l.b16 %v184
    %v221 = vunpack.c.l.b16 %v185
    %v222 = vunpack.c.l.b16 %v186
    %v223 = vunpack.c.l.b16 %v187
    %v224 = vunpack.c.l.b16 %v188
    %v225 = vunpack.c.l.b16 %v189
    %v226 = vunpack.c.l.b16 %v190
    %v227 = vunpack.c.l.b16 %v191
    %v228 = vunpack.c.l.b16 %v192
    %v229 = vunpack.c.l.b16 %v193
    %v230 = vunpack.c.l.b16 %v194
    %v231 = vunpack.c.l.b16 %v195
    %v232 = vunpack.c.l.b16 %v196
    %v233 = vunpack.c.l.b16 %v197
    %v234 = vunpack.c.l.b16 %v198
    %v235 = vunpack.c.l.b16 %v199
    %v236 = vpack.c.b16 %v221, %v220
    %v237 = vpack.c.b16 %v223, %v222
    %v238 = vpack.c.b16 %v225, %v224
    %v239 = vpack.c.b16 %v227, %v226
    %v240 = vpack.c.b16 %v229, %v228
    %v241 = vpack.c.b16 %v231, %v230
    %v242 = vpack.c.b16 %v233, %v232
    %v243 = vpack.c.b16 %v235, %v234
    %252 = vmatprep.subr.bf16.mxu0 0
    %253 = vmatpush1.bf16.msra.mxu0 %v236
    %254 = vmatprep.subr.bf16.mxu0 0
    %255 = vmatpush1.bf16.msra.mxu0 %v237
    %256 = vmatprep.subr.bf16.mxu0 0
    %257 = vmatpush1.bf16.msra.mxu0 %v238
    %258 = vmatprep.subr.bf16.mxu0 0
    %259 = vmatpush1.bf16.msra.mxu0 %v239
    %260 = vmatprep.subr.bf16.mxu0 0
    %261 = vmatpush1.bf16.msra.mxu0 %v240
    %262 = vmatprep.subr.bf16.mxu0 0
    %263 = vmatpush1.bf16.msra.mxu0 %v241
    %264 = vmatprep.subr.bf16.mxu0 0
    %265 = vmatpush1.bf16.msra.mxu0 %v242
    %266 = vmatprep.subr.bf16.mxu0 0
    %267 = vmatpush1.bf16.msra.mxu0 %v243
    %268 = vmatprep.subr.bf16.mxu0 0
    %269 = vmatpush1.bf16.msra.mxu0 0
    %270 = vmatprep.subr.bf16.mxu0 0
    %271 = vmatpush1.bf16.msra.mxu0 0
    %272 = vmatprep.subr.bf16.mxu0 0
    %273 = vmatpush1.bf16.msra.mxu0 0
    %274 = vmatprep.subr.bf16.mxu0 0
    %275 = vmatpush1.bf16.msra.mxu0 0
    %276 = vmatprep.subr.bf16.mxu0 0
    %277 = vmatpush1.bf16.msra.mxu0 0
    %278 = vmatprep.subr.bf16.mxu0 0
    %279 = vmatpush1.bf16.msra.mxu0 0
    %280 = vmatprep.subr.bf16.mxu0 0
    %281 = vmatpush1.bf16.msra.mxu0 0
    %282 = vmatprep.subr.bf16.mxu0 0
    %283 = vmatpush1.bf16.msra.mxu0 0
    %284 = vmatprep.mubr.bf16.mxu0 0
    %285 = vmatmul.mubr.bf16.gmra.mrb[0].mxu0 %v182
    %v286 = vpop.f32.mrb[0].mxu0
    %v287 = vadd.f32 %v203, %v286
    %v288 = vpop.f32.mrb[0].mxu0
    %v289 = vpop.f32.mrb[0].mxu0
    %v290 = vpop.f32.mrb[0].mxu0
    %291 = vdwg.mxu0
    %v292 = vrot.slane %v287, 4
    %v293 = vadd.f32 %v287, %v292
    %v294 = vrot.slane %v293, 2
    %v295 = vadd.f32 %v293, %v294
    %v296 = vrot.slane %v295, 1
    %v297 = vadd.f32 %v295, %v296
    %v298 = vmul.f32 %v297, %v164
    %v299 = vmul.f32 %v287, %v287
    %v300 = vrot.slane %v299, 4
    %v301 = vadd.f32 %v299, %v300
    %v302 = vrot.slane %v301, 2
    %v303 = vadd.f32 %v301, %v302
    %v304 = vrot.slane %v303, 1
    %v305 = vadd.f32 %v303, %v304
    %v306 = vmul.f32 %v305, %v164
    %v307 = vmul.f32 %v298, %v298
    %v308 = vsub.f32 %v306, %v307
    %v309 = vmax.f32 %v308, 0.0
    %v310 = vsub.f32 %v287, %v298
    %v311 = vadd.f32 %v309, 1e-05
    %v312 = vrsqrt.pop %v311
    %v313 = vmul.f32 %v310, %v312
    %v314 = vmax.f32 %v313, 0.0
    %v315 = vpack.c.bf16 %v314, %v314
    %s316 = scalar_lea.vmem [#allocation5], 128
    %v317 = vld [vmem:[%s316] sm:$0xf]
    %v318 = vld [vmem:[%s316 + $0x4] sm:$0xf]
    %v319 = vld [vmem:[%s316 + $0x8] sm:$0xf]
    %v320 = vld [vmem:[%s316 + $0xc] sm:$0xf]
    %v321 = vld [vmem:[%s316 + $0x10] sm:$0xf]
    %v322 = vld [vmem:[%s316 + $0x14] sm:$0xf]
    %v323 = vld [vmem:[%s316 + $0x18] sm:$0xf]
    %v324 = vld [vmem:[%s316 + $0x1c] sm:$0xf]
    %v325 = vld [vmem:[%s316 + $0x20] sm:$0xf]
    %v326 = vld [vmem:[%s316 + $0x24] sm:$0xf]
    %v327 = vld [vmem:[%s316 + $0x28] sm:$0xf]
    %v328 = vld [vmem:[%s316 + $0x2c] sm:$0xf]
    %v329 = vld [vmem:[%s316 + $0x30] sm:$0xf]
    %v330 = vld [vmem:[%s316 + $0x34] sm:$0xf]
    %v331 = vld [vmem:[%s316 + $0x38] sm:$0xf]
    %v332 = vld [vmem:[%s316 + $0x3c] sm:$0xf]
    %v333 = vlaneseq
    %v334 = vshrl.u32 %v333, 7
    %v335 = vsub.s32 2, %v334
    %v336 = vrot.slane %v48, %v335
    %v353 = vunpack.c.l.b16 %v317
    %v354 = vunpack.c.l.b16 %v318
    %v355 = vunpack.c.l.b16 %v319
    %v356 = vunpack.c.l.b16 %v320
    %v357 = vunpack.c.l.b16 %v321
    %v358 = vunpack.c.l.b16 %v322
    %v359 = vunpack.c.l.b16 %v323
    %v360 = vunpack.c.l.b16 %v324
    %v361 = vunpack.c.l.b16 %v325
    %v362 = vunpack.c.l.b16 %v326
    %v363 = vunpack.c.l.b16 %v327
    %v364 = vunpack.c.l.b16 %v328
    %v365 = vunpack.c.l.b16 %v329
    %v366 = vunpack.c.l.b16 %v330
    %v367 = vunpack.c.l.b16 %v331
    %v368 = vunpack.c.l.b16 %v332
    %v369 = vpack.c.b16 %v354, %v353
    %v370 = vpack.c.b16 %v356, %v355
    %v371 = vpack.c.b16 %v358, %v357
    %v372 = vpack.c.b16 %v360, %v359
    %v373 = vpack.c.b16 %v362, %v361
    %v374 = vpack.c.b16 %v364, %v363
    %v375 = vpack.c.b16 %v366, %v365
    %v376 = vpack.c.b16 %v368, %v367
    %385 = vmatprep.subr.bf16.mxu0 0
    %386 = vmatpush1.bf16.msra.mxu0 %v369
    %387 = vmatprep.subr.bf16.mxu0 0
    %388 = vmatpush1.bf16.msra.mxu0 %v370
    %389 = vmatprep.subr.bf16.mxu0 0
    %390 = vmatpush1.bf16.msra.mxu0 %v371
    %391 = vmatprep.subr.bf16.mxu0 0
    %392 = vmatpush1.bf16.msra.mxu0 %v372
    %393 = vmatprep.subr.bf16.mxu0 0
    %394 = vmatpush1.bf16.msra.mxu0 %v373
    %395 = vmatprep.subr.bf16.mxu0 0
    %396 = vmatpush1.bf16.msra.mxu0 %v374
    %397 = vmatprep.subr.bf16.mxu0 0
    %398 = vmatpush1.bf16.msra.mxu0 %v375
    %399 = vmatprep.subr.bf16.mxu0 0
    %400 = vmatpush1.bf16.msra.mxu0 %v376
    %401 = vmatprep.subr.bf16.mxu0 0
    %402 = vmatpush1.bf16.msra.mxu0 0
    %403 = vmatprep.subr.bf16.mxu0 0
    %404 = vmatpush1.bf16.msra.mxu0 0
    %405 = vmatprep.subr.bf16.mxu0 0
    %406 = vmatpush1.bf16.msra.mxu0 0
    %407 = vmatprep.subr.bf16.mxu0 0
    %408 = vmatpush1.bf16.msra.mxu0 0
    %409 = vmatprep.subr.bf16.mxu0 0
    %410 = vmatpush1.bf16.msra.mxu0 0
    %411 = vmatprep.subr.bf16.mxu0 0
    %412 = vmatpush1.bf16.msra.mxu0 0
    %413 = vmatprep.subr.bf16.mxu0 0
    %414 = vmatpush1.bf16.msra.mxu0 0
    %415 = vmatprep.subr.bf16.mxu0 0
    %416 = vmatpush1.bf16.msra.mxu0 0
    %417 = vmatprep.mubr.bf16.mxu0 0
    %418 = vmatmul.mubr.bf16.gmra.mrb[0].mxu0 %v315
    %v419 = vpop.f32.mrb[0].mxu0
    %v420 = vadd.f32 %v336, %v419
    %v421 = vpop.f32.mrb[0].mxu0
    %v422 = vpop.f32.mrb[0].mxu0
    %v423 = vpop.f32.mrb[0].mxu0
    %424 = vdwg.mxu0
    %425 = vst [vmem:[#allocation7] sm:$0xff] %v420
    // Predicated region
    $region22: #{tpu_custom_call.1} parent=1 // pred_check
      _
    $region23: #{tpu_custom_call.1} parent=1 // pred_check_branch
      %427 = sbr.rel (0) target = $region25
    $region24: #{tpu_custom_call.1} parent=1 // pred_region
      %s429 = ssub.s32 128, 128
      %430 = vsyncadd [#allocation4], %s429
      %s432 = sshll.u32 [#allocation7], 4
      %s433 = int_to_ptr.vmem [resolvable:$true] %s432
      %435 = dma.vmem_to_hbm [thread:$0]  %s433, 128, %s3, [#allocation4]
    $region25: #{tpu_custom_call.1} parent=1 // pred_fallthru
      _
    // Predicated region
    $region26: #{tpu_custom_call.1} parent=1 // pred_check
      _
    $region27: #{tpu_custom_call.1} parent=1 // pred_check_branch
      %437 = sbr.rel (0) target = $region29
    $region28: #{tpu_custom_call.1} parent=1 // pred_region
      %438 = dma.done [#allocation4], 128
    $region29: #{tpu_custom_call.1} parent=1 // pred_fallthru
      _
    %439 = vsyncpa [#allocation3], 1
    %440 = vsyncpa [#allocation6], 1
    %441 = vsyncpa [#allocation4], 1

</llo_original>
